<compile_context>
chip_gen: v5e
topology: v5e:2x2
jax: 0.10.0
libtpu: 0.0.40
codegen_flags: <defaults>
</compile_context>

<pallas_src>
import functools

import numpy as np
import jax
import jax.numpy as jnp
from jax import lax
from jax.experimental import pallas as pl
from jax.experimental.pallas import tpu as pltpu


def _adjust_list_length(lst, length):
    return lst + [lst[-1]] * (length - len(lst)) if len(lst) < length else lst


def _voronoi_kernel(px_ref, py_ref, out_ref, tmin_ref, tmax_ref, *,
                    tile_rows, width, n_pixels, n_points, metric, unroll):
    """Nearest-seed distance for one lane-dense (tile_rows, 128) pixel tile.

    px_ref / py_ref: flattened (B * P,) seed coordinate tables in SMEM (scalar
    reads broadcast into the tile; no VMEM vector blocks / reshapes for points).
    out_ref:  (1, tile_rows, 128) raw distance block (flat pixel order).
    tmin_ref / tmax_ref: (1, 1, 8, 128) per-tile min / max of the distance map
    (flat-padding pixels excluded) so normalization never re-reads `raw`.
    """
    b = pl.program_id(0)
    t = pl.program_id(1)
    base = t * (tile_rows * 128)

    # Flat pixel index -> image coordinates (x = p % W, y = p // W).  Division
    # is done in f32 (exact for p < 2**24) with a one-step integer correction,
    # keeping everything on the VPU (no integer divide).
    row_i = lax.broadcasted_iota(jnp.int32, (tile_rows, 128), 0)
    lane_i = lax.broadcasted_iota(jnp.int32, (tile_rows, 128), 1)
    p_idx = base + row_i * 128 + lane_i
    p_f = p_idx.astype(jnp.float32)
    w_f = jnp.float32(width)
    gy = jnp.floor(p_f * jnp.float32(1.0 / width))
    gx = p_f - gy * w_f
    under = gx < 0.0
    gy = jnp.where(under, gy - 1.0, gy)
    gx = jnp.where(under, gx + w_f, gx)
    over = gx >= w_f
    gy = jnp.where(over, gy + 1.0, gy)
    gx = jnp.where(over, gx - w_f, gx)

    init = jnp.full((tile_rows, 128), jnp.inf, dtype=jnp.float32)
    pbase = b * n_points

    def body(i, running):
        px = px_ref[pbase + i]
        py = py_ref[pbase + i]
        dx = gx - px
        dy = gy - py
        if metric == 'euclidean':
            d = dx * dx + dy * dy                     # sqrt deferred past the min
        elif metric == 'manhattan':
            d = jnp.abs(dx) + jnp.abs(dy)
        elif metric == 'chebyshev':
            d = jnp.maximum(jnp.abs(dx), jnp.abs(dy))
        else:                                         # minkowski, p = 3
            ax = jnp.abs(dx)
            ay = jnp.abs(dy)
            d = ax * ax * ax + ay * ay * ay           # cube root deferred past the min
        return jnp.minimum(running, d)

    # Fully unrolled for small point counts: the whole body is visible to the
    # LLO scheduler and the per-point SMEM scalar loads are hidden.
    min_d = lax.fori_loop(0, n_points, body, init, unroll=unroll)

    if metric == 'euclidean':
        min_d = jnp.sqrt(min_d)                       # one sqrt per pixel, not per point
    elif metric == 'minkowski':
        safe = jnp.maximum(min_d, jnp.float32(1e-30))
        root = jnp.exp(jnp.log(safe) * jnp.float32(1.0 / 3.0))
        min_d = jnp.where(min_d > 0, root, jnp.float32(0.0))

    out_ref[0] = min_d

    # Per-tile min/max (XLU reduce, essentially free next to the VALU loop);
    # flat-padding pixels (p >= H*W) are excluded.
    valid = p_idx < n_pixels
    t_min = jnp.min(jnp.where(valid, min_d, jnp.inf))
    t_max = jnp.max(jnp.where(valid, min_d, -jnp.inf))
    tmin_ref[0, 0] = jnp.full((8, 128), t_min, dtype=jnp.float32)
    tmax_ref[0, 0] = jnp.full((8, 128), t_max, dtype=jnp.float32)


def _build_points(width, height, scale, detail, seed, randomness, X, Y, batch_size):
    """Host-side glue reproducing the seed-point construction (numpy / jax.random)."""
    px_list, py_list = [], []
    for b in range(batch_size):
        s = int(np.sqrt(detail[b]))
        # TODO(synk): detail[b] < 1 gives s == 0 and a divide-by-zero spacing, exactly
        # like the PyTorch module; no guard added to keep semantics identical.
        spacing = max(width, height) / s
        offs = np.arange(-s // 2, s // 2 + 1, dtype=np.float32) * spacing
        gxs, gys = np.meshgrid(offs, offs, indexing='xy')
        points = np.stack([gxs.flatten(), gys.flatten()], axis=-1).astype(np.float32)
        # TODO(synk): torch.manual_seed + torch.rand RNG stream cannot be reproduced
        # bit-exactly in JAX; use a deterministic jax.random stream keyed on `seed`.
        key = jax.random.fold_in(jax.random.PRNGKey(0), int(seed[b]))
        ro = np.asarray(jax.random.uniform(key, points.shape), np.float32) * 2.0 - 1.0
        ro = ro * float(randomness[b]) * spacing / 2.0
        points = points + ro
        points[len(points) // 2] = np.array([0.0, 0.0], np.float32)
        points = points * float(scale[b])
        points = points + np.array([X[b], Y[b]], np.float32)
        points = points + np.array([width // 2, height // 2], np.float32)
        px_list.append(points[:, 0].astype(np.float32))
        py_list.append(points[:, 1].astype(np.float32))

    # Pad every batch to the common point count by duplicating its OWN last point:
    # duplicates do not change the min-distance. (Do NOT pad with zeros.)
    p_max = max(len(p) for p in px_list)
    px = np.zeros((batch_size, p_max), np.float32)
    py = np.zeros((batch_size, p_max), np.float32)
    for b in range(batch_size):
        n = len(px_list[b])
        px[b, :n] = px_list[b]
        px[b, n:] = px_list[b][-1]
        py[b, :n] = py_list[b]
        py[b, n:] = py_list[b][-1]
    return px, py, p_max


def _choose_tile_rows(rows_total, batch_size, target_rows=4096, min_steps=4):
    """Tile height in 128-pixel rows.

    ~512K pixels (2 MiB f32) per tile amortizes the ~600-cycle per-grid-step
    overhead while keeping live tile temporaries + the double-buffered output
    well under the scoped VMEM limit on all generations (explicit 48 MiB limit
    below leaves headroom on v7x's 64 MiB physical VMEM).  The tile is shrunk
    (in multiples of 8 sublanes) only until there are >= `min_steps` parallel
    grid steps so v7x's two TensorCores both get work; this is a no-op for tiny
    images and costs ~1 us of extra step overhead on 1-TC chips.
    """
    tile = min(target_rows, rows_total)
    if tile < rows_total:
        tile = max(8, (tile // 8) * 8)

    def n_steps(t):
        return batch_size * (-(-rows_total // t))

    while n_steps(tile) < min_steps and tile > 8:
        nxt = max(8, ((tile // 2) // 8) * 8)
        if nxt >= tile:
            break
        tile = nxt
    return tile


def voronoi_noise(width, height, scale, detail, seed, randomness, X=None, Y=None,
                  distance_metric='euclidean', batch_size=1):
    if distance_metric not in ('euclidean', 'manhattan', 'chebyshev', 'minkowski'):
        raise ValueError('Unsupported distance metric')

    X = [0] if X is None else list(X)
    Y = [0] if Y is None else list(Y)
    scale = _adjust_list_length(list(scale), batch_size)
    detail = _adjust_list_length(list(detail), batch_size)
    seed = _adjust_list_length(list(seed), batch_size)
    randomness = _adjust_list_length(list(randomness), batch_size)
    X = _adjust_list_length(X, batch_size)
    Y = _adjust_list_length(Y, batch_size)

    px, py, n_points = _build_points(width, height, scale, detail, seed, randomness,
                                     X, Y, batch_size)
    # 1-D SMEM tables (2-D SMEM pads rows to 8 and lanes to 128; 1-D avoids that).
    px_flat = jnp.asarray(px.reshape(-1))
    py_flat = jnp.asarray(py.reshape(-1))

    n_pixels = height * width
    rows_total = -(-n_pixels // 128)                  # 128-lane rows per image
    tile_rows = _choose_tile_rows(rows_total, batch_size)
    n_tiles = -(-rows_total // tile_rows)
    rows_pad = n_tiles * tile_rows

    # Fully unroll the point loop when it is small (typical detail -> ~25 points).
    unroll = n_points if n_points <= 64 else 8

    kernel = functools.partial(
        _voronoi_kernel, tile_rows=tile_rows, width=width, n_pixels=n_pixels,
        n_points=n_points, metric=distance_metric, unroll=unroll)

    flops_per_pt = {'euclidean': 6, 'manhattan': 6, 'chebyshev': 6, 'minkowski': 10}
    total_px = batch_size * rows_pad * 128
    trans_per_px = {'euclidean': 1, 'manhattan': 0, 'chebyshev': 0, 'minkowski': 2}
    cost = pl.CostEstimate(
        flops=total_px * n_points * flops_per_pt[distance_metric],
        transcendentals=total_px * trans_per_px[distance_metric],
        bytes_accessed=(total_px * 4
                        + 2 * batch_size * n_tiles * 8 * 128 * 4
                        + 2 * int(px_flat.size) * 4))

    raw, tmins, tmaxs = pl.pallas_call(
        kernel,
        out_shape=(
            jax.ShapeDtypeStruct((batch_size, rows_pad, 128), jnp.float32),
            jax.ShapeDtypeStruct((batch_size, n_tiles, 8, 128), jnp.float32),
            jax.ShapeDtypeStruct((batch_size, n_tiles, 8, 128), jnp.float32),
        ),
        grid=(batch_size, n_tiles),
        in_specs=[
            pl.BlockSpec(memory_space=pltpu.MemorySpace.SMEM),   # px: (B*P,) seed x
            pl.BlockSpec(memory_space=pltpu.MemorySpace.SMEM),   # py: (B*P,) seed y
        ],
        out_specs=[
            pl.BlockSpec((1, tile_rows, 128), lambda b, t: (b, t, 0)),
            pl.BlockSpec((1, 1, 8, 128), lambda b, t: (b, t, 0, 0)),
            pl.BlockSpec((1, 1, 8, 128), lambda b, t: (b, t, 0, 0)),
        ],
        compiler_params=pltpu.CompilerParams(
            dimension_semantics=("parallel", "parallel"),
            vmem_limit_bytes=48 * 1024 * 1024),
        cost_estimate=cost,
    )(px_flat, py_flat)

    # Per-image min/max from the tiny per-tile tables (no re-read of raw from HBM).
    mn = jnp.min(tmins, axis=(1, 2, 3)).reshape(batch_size, 1, 1)
    mx = jnp.max(tmaxs, axis=(1, 2, 3)).reshape(batch_size, 1, 1)
    # Degenerate flat map guarded with denom=1 (PyTorch would produce NaN/inf here).
    denom = jnp.where(mx > mn, mx - mn, jnp.float32(1.0))

    # Single fused epilogue pass: drop flat padding, normalize, expand to 3 channels.
    raw_img = raw.reshape(batch_size, -1)[:, :n_pixels].reshape(batch_size, height, width)
    norm = (raw_img - mn) / denom
    return jnp.broadcast_to(norm[..., None], (batch_size, height, width, 3))


def _voronoi_reference(px, py, width, height, metric):
    """Pure numpy reference (same seed points, same distance / normalize math)."""
    ys, xs = np.meshgrid(np.arange(height, dtype=np.float32),
                         np.arange(width, dtype=np.float32), indexing='ij')
    outs = []
    for b in range(px.shape[0]):
        dx = xs[..., None] - px[b][None, None, :]
        dy = ys[..., None] - py[b][None, None, :]
        if metric == 'euclidean':
            d = np.sqrt(dx * dx + dy * dy)
        elif metric == 'manhattan':
            d = np.abs(dx) + np.abs(dy)
        elif metric == 'chebyshev':
            d = np.maximum(np.abs(dx), np.abs(dy))
        else:
            d = (np.abs(dx) ** 3 + np.abs(dy) ** 3) ** (1.0 / 3.0)
        mind = d.min(axis=-1)
        mn, mx = mind.min(), mind.max()
        outs.append((mind - mn) / (mx - mn))
    out = np.stack(outs, axis=0)
    return np.repeat(out[..., None], 3, axis=-1)


if __name__ == "__main__":
    B, H, W = 2, 16, 16
    scale = [1.0, 1.5]
    detail = [16]
    seed = [0, 7]
    randomness = [0.5]
    X = [0.0]
    Y = [0.0]
    metric = 'euclidean'

    out = voronoi_noise(width=W, height=H, scale=scale, detail=detail, seed=seed,
                        randomness=randomness, X=X, Y=Y,
                        distance_metric=metric, batch_size=B)
    out = jax.block_until_ready(out)

    # Host reference with the same deterministic (PRNGKey(0)-derived) seed points.
    px, py, _ = _build_points(W, H,
                              _adjust_list_length(scale, B),
                              _adjust_list_length(detail, B),
                              _adjust_list_length(seed, B),
                              _adjust_list_length(randomness, B),
                              _adjust_list_length(X, B),
                              _adjust_list_length(Y, B), B)
    ref = _voronoi_reference(px, py, W, H, metric)

    assert out.shape == (B, H, W, 3) and out.dtype == jnp.float32
    assert bool(jnp.isfinite(out).all())
    assert bool((out >= 0.0).all()) and bool((out <= 1.0).all())
    np.testing.assert_allclose(np.asarray(out), ref, rtol=1e-4, atol=1e-4)
    print("KERNEL_OK")
</pallas_src>

<mosaic_0001>
module attributes {stable_mosaic.version = 11 : i64} {
  func.func @_voronoi_kernel(%arg0: i32, %arg1: i32, %arg2: memref<50xf32, #tpu.memory_space<smem>>, %arg3: memref<50xf32, #tpu.memory_space<smem>>, %arg4: memref<1x2x128xf32, #tpu.memory_space<vmem>>, %arg5: memref<1x1x8x128xf32, #tpu.memory_space<vmem>>, %arg6: memref<1x1x8x128xf32, #tpu.memory_space<vmem>>) attributes {dimension_semantics = [#tpu.dimension_semantics<parallel>, #tpu.dimension_semantics<parallel>], iteration_bounds = array<i64: 2, 1>, scalar_prefetch = 0 : i64, scratch_operands = 0 : i64, tpu.core_type = #tpu.core_type<tc>, window_params = [{transform_indices = @transform_0, window_bounds = array<i64: 50>}, {transform_indices = @transform_1, window_bounds = array<i64: 50>}, {transform_indices = @transform_2, window_bounds = array<i64: 1, 2, 128>}, {transform_indices = @transform_3, window_bounds = array<i64: 1, 1, 8, 128>}, {transform_indices = @transform_4, window_bounds = array<i64: 1, 1, 8, 128>}]} {
    %c256_i32 = arith.constant 256 : i32
    %0 = arith.muli %arg1, %c256_i32 : i32
    %1 = tpu.iota {dimensions = array<i32: 0>} : vector<2x128xi32>
    %2 = tpu.iota {dimensions = array<i32: 1>} : vector<2x128xi32>
    %c128_i32 = arith.constant 128 : i32
    %3 = vector.broadcast %c128_i32 : i32 to vector<2x128xi32>
    %4 = arith.muli %1, %3 : vector<2x128xi32>
    %5 = vector.broadcast %0 : i32 to vector<2x128xi32>
    %6 = arith.addi %5, %4 : vector<2x128xi32>
    %7 = arith.addi %6, %2 : vector<2x128xi32>
    %8 = arith.sitofp %7 : vector<2x128xi32> to vector<2x128xf32>
    %cst = arith.constant 6.250000e-02 : f32
    %9 = vector.broadcast %cst : f32 to vector<2x128xf32>
    %10 = arith.mulf %8, %9 : vector<2x128xf32>
    %11 = math.floor %10 : vector<2x128xf32>
    %cst_0 = arith.constant 1.600000e+01 : f32
    %12 = vector.broadcast %cst_0 : f32 to vector<2x128xf32>
    %13 = arith.mulf %11, %12 : vector<2x128xf32>
    %14 = arith.subf %8, %13 : vector<2x128xf32>
    %cst_1 = arith.constant 0.000000e+00 : f32
    %15 = vector.broadcast %cst_1 : f32 to vector<2x128xf32>
    %16 = arith.cmpf olt, %14, %15 : vector<2x128xf32>
    %cst_2 = arith.constant 1.000000e+00 : f32
    %17 = vector.broadcast %cst_2 : f32 to vector<2x128xf32>
    %18 = arith.subf %11, %17 : vector<2x128xf32>
    %19 = arith.select %16, %18, %11 : vector<2x128xi1>, vector<2x128xf32>
    %cst_3 = arith.constant 1.600000e+01 : f32
    %20 = vector.broadcast %cst_3 : f32 to vector<2x128xf32>
    %21 = arith.addf %14, %20 : vector<2x128xf32>
    %22 = arith.select %16, %21, %14 : vector<2x128xi1>, vector<2x128xf32>
    %cst_4 = arith.constant 1.600000e+01 : f32
    %23 = vector.broadcast %cst_4 : f32 to vector<2x128xf32>
    %24 = arith.cmpf oge, %22, %23 : vector<2x128xf32>
    %cst_5 = arith.constant 1.000000e+00 : f32
    %25 = vector.broadcast %cst_5 : f32 to vector<2x128xf32>
    %26 = arith.addf %19, %25 : vector<2x128xf32>
    %27 = arith.select %24, %26, %19 : vector<2x128xi1>, vector<2x128xf32>
    %cst_6 = arith.constant 1.600000e+01 : f32
    %28 = vector.broadcast %cst_6 : f32 to vector<2x128xf32>
    %29 = arith.subf %22, %28 : vector<2x128xf32>
    %30 = arith.select %24, %29, %22 : vector<2x128xi1>, vector<2x128xf32>
    %cst_7 = arith.constant 0x7F800000 : f32
    %31 = vector.broadcast %cst_7 : f32 to vector<2x128xf32>
    %c25_i32 = arith.constant 25 : i32
    %32 = arith.muli %arg0, %c25_i32 : i32
    %c0_i32 = arith.constant 0 : i32
    %33 = arith.addi %32, %c0_i32 : i32
    %34 = arith.index_cast %33 : i32 to index
    %35 = memref.load %arg2[%34] : memref<50xf32, #tpu.memory_space<smem>>
    %36 = arith.addi %32, %c0_i32 : i32
    %37 = arith.index_cast %36 : i32 to index
    %38 = memref.load %arg3[%37] : memref<50xf32, #tpu.memory_space<smem>>
    %39 = vector.broadcast %35 : f32 to vector<2x128xf32>
    %40 = arith.subf %30, %39 : vector<2x128xf32>
    %41 = vector.broadcast %38 : f32 to vector<2x128xf32>
    %42 = arith.subf %27, %41 : vector<2x128xf32>
    %43 = arith.mulf %40, %40 : vector<2x128xf32>
    %44 = arith.mulf %42, %42 : vector<2x128xf32>
    %45 = arith.addf %43, %44 : vector<2x128xf32>
    %46 = arith.minimumf %31, %45 : vector<2x128xf32>
    %c1_i32 = arith.constant 1 : i32
    %47 = arith.addi %32, %c1_i32 : i32
    %48 = arith.index_cast %47 : i32 to index
    %49 = memref.load %arg2[%48] : memref<50xf32, #tpu.memory_space<smem>>
    %50 = arith.addi %32, %c1_i32 : i32
    %51 = arith.index_cast %50 : i32 to index
    %52 = memref.load %arg3[%51] : memref<50xf32, #tpu.memory_space<smem>>
    %53 = vector.broadcast %49 : f32 to vector<2x128xf32>
    %54 = arith.subf %30, %53 : vector<2x128xf32>
    %55 = vector.broadcast %52 : f32 to vector<2x128xf32>
    %56 = arith.subf %27, %55 : vector<2x128xf32>
    %57 = arith.mulf %54, %54 : vector<2x128xf32>
    %58 = arith.mulf %56, %56 : vector<2x128xf32>
    %59 = arith.addf %57, %58 : vector<2x128xf32>
    %60 = arith.minimumf %46, %59 : vector<2x128xf32>
    %c2_i32 = arith.constant 2 : i32
    %61 = arith.addi %32, %c2_i32 : i32
    %62 = arith.index_cast %61 : i32 to index
    %63 = memref.load %arg2[%62] : memref<50xf32, #tpu.memory_space<smem>>
    %64 = arith.addi %32, %c2_i32 : i32
    %65 = arith.index_cast %64 : i32 to index
    %66 = memref.load %arg3[%65] : memref<50xf32, #tpu.memory_space<smem>>
    %67 = vector.broadcast %63 : f32 to vector<2x128xf32>
    %68 = arith.subf %30, %67 : vector<2x128xf32>
    %69 = vector.broadcast %66 : f32 to vector<2x128xf32>
    %70 = arith.subf %27, %69 : vector<2x128xf32>
    %71 = arith.mulf %68, %68 : vector<2x128xf32>
    %72 = arith.mulf %70, %70 : vector<2x128xf32>
    %73 = arith.addf %71, %72 : vector<2x128xf32>
    %74 = arith.minimumf %60, %73 : vector<2x128xf32>
    %c3_i32 = arith.constant 3 : i32
    %75 = arith.addi %32, %c3_i32 : i32
    %76 = arith.index_cast %75 : i32 to index
    %77 = memref.load %arg2[%76] : memref<50xf32, #tpu.memory_space<smem>>
    %78 = arith.addi %32, %c3_i32 : i32
    %79 = arith.index_cast %78 : i32 to index
    %80 = memref.load %arg3[%79] : memref<50xf32, #tpu.memory_space<smem>>
    %81 = vector.broadcast %77 : f32 to vector<2x128xf32>
    %82 = arith.subf %30, %81 : vector<2x128xf32>
    %83 = vector.broadcast %80 : f32 to vector<2x128xf32>
    %84 = arith.subf %27, %83 : vector<2x128xf32>
    %85 = arith.mulf %82, %82 : vector<2x128xf32>
    %86 = arith.mulf %84, %84 : vector<2x128xf32>
    %87 = arith.addf %85, %86 : vector<2x128xf32>
    %88 = arith.minimumf %74, %87 : vector<2x128xf32>
    %c4_i32 = arith.constant 4 : i32
    %89 = arith.addi %32, %c4_i32 : i32
    %90 = arith.index_cast %89 : i32 to index
    %91 = memref.load %arg2[%90] : memref<50xf32, #tpu.memory_space<smem>>
    %92 = arith.addi %32, %c4_i32 : i32
    %93 = arith.index_cast %92 : i32 to index
    %94 = memref.load %arg3[%93] : memref<50xf32, #tpu.memory_space<smem>>
    %95 = vector.broadcast %91 : f32 to vector<2x128xf32>
    %96 = arith.subf %30, %95 : vector<2x128xf32>
    %97 = vector.broadcast %94 : f32 to vector<2x128xf32>
    %98 = arith.subf %27, %97 : vector<2x128xf32>
    %99 = arith.mulf %96, %96 : vector<2x128xf32>
    %100 = arith.mulf %98, %98 : vector<2x128xf32>
    %101 = arith.addf %99, %100 : vector<2x128xf32>
    %102 = arith.minimumf %88, %101 : vector<2x128xf32>
    %c5_i32 = arith.constant 5 : i32
    %103 = arith.addi %32, %c5_i32 : i32
    %104 = arith.index_cast %103 : i32 to index
    %105 = memref.load %arg2[%104] : memref<50xf32, #tpu.memory_space<smem>>
    %106 = arith.addi %32, %c5_i32 : i32
    %107 = arith.index_cast %106 : i32 to index
    %108 = memref.load %arg3[%107] : memref<50xf32, #tpu.memory_space<smem>>
    %109 = vector.broadcast %105 : f32 to vector<2x128xf32>
    %110 = arith.subf %30, %109 : vector<2x128xf32>
    %111 = vector.broadcast %108 : f32 to vector<2x128xf32>
    %112 = arith.subf %27, %111 : vector<2x128xf32>
    %113 = arith.mulf %110, %110 : vector<2x128xf32>
    %114 = arith.mulf %112, %112 : vector<2x128xf32>
    %115 = arith.addf %113, %114 : vector<2x128xf32>
    %116 = arith.minimumf %102, %115 : vector<2x128xf32>
    %c6_i32 = arith.constant 6 : i32
    %117 = arith.addi %32, %c6_i32 : i32
    %118 = arith.index_cast %117 : i32 to index
    %119 = memref.load %arg2[%118] : memref<50xf32, #tpu.memory_space<smem>>
    %120 = arith.addi %32, %c6_i32 : i32
    %121 = arith.index_cast %120 : i32 to index
    %122 = memref.load %arg3[%121] : memref<50xf32, #tpu.memory_space<smem>>
    %123 = vector.broadcast %119 : f32 to vector<2x128xf32>
    %124 = arith.subf %30, %123 : vector<2x128xf32>
    %125 = vector.broadcast %122 : f32 to vector<2x128xf32>
    %126 = arith.subf %27, %125 : vector<2x128xf32>
    %127 = arith.mulf %124, %124 : vector<2x128xf32>
    %128 = arith.mulf %126, %126 : vector<2x128xf32>
    %129 = arith.addf %127, %128 : vector<2x128xf32>
    %130 = arith.minimumf %116, %129 : vector<2x128xf32>
    %c7_i32 = arith.constant 7 : i32
    %131 = arith.addi %32, %c7_i32 : i32
    %132 = arith.index_cast %131 : i32 to index
    %133 = memref.load %arg2[%132] : memref<50xf32, #tpu.memory_space<smem>>
    %134 = arith.addi %32, %c7_i32 : i32
    %135 = arith.index_cast %134 : i32 to index
    %136 = memref.load %arg3[%135] : memref<50xf32, #tpu.memory_space<smem>>
    %137 = vector.broadcast %133 : f32 to vector<2x128xf32>
    %138 = arith.subf %30, %137 : vector<2x128xf32>
    %139 = vector.broadcast %136 : f32 to vector<2x128xf32>
    %140 = arith.subf %27, %139 : vector<2x128xf32>
    %141 = arith.mulf %138, %138 : vector<2x128xf32>
    %142 = arith.mulf %140, %140 : vector<2x128xf32>
    %143 = arith.addf %141, %142 : vector<2x128xf32>
    %144 = arith.minimumf %130, %143 : vector<2x128xf32>
    %c8_i32 = arith.constant 8 : i32
    %145 = arith.addi %32, %c8_i32 : i32
    %146 = arith.index_cast %145 : i32 to index
    %147 = memref.load %arg2[%146] : memref<50xf32, #tpu.memory_space<smem>>
    %148 = arith.addi %32, %c8_i32 : i32
    %149 = arith.index_cast %148 : i32 to index
    %150 = memref.load %arg3[%149] : memref<50xf32, #tpu.memory_space<smem>>
    %151 = vector.broadcast %147 : f32 to vector<2x128xf32>
    %152 = arith.subf %30, %151 : vector<2x128xf32>
    %153 = vector.broadcast %150 : f32 to vector<2x128xf32>
    %154 = arith.subf %27, %153 : vector<2x128xf32>
    %155 = arith.mulf %152, %152 : vector<2x128xf32>
    %156 = arith.mulf %154, %154 : vector<2x128xf32>
    %157 = arith.addf %155, %156 : vector<2x128xf32>
    %158 = arith.minimumf %144, %157 : vector<2x128xf32>
    %c9_i32 = arith.constant 9 : i32
    %159 = arith.addi %32, %c9_i32 : i32
    %160 = arith.index_cast %159 : i32 to index
    %161 = memref.load %arg2[%160] : memref<50xf32, #tpu.memory_space<smem>>
    %162 = arith.addi %32, %c9_i32 : i32
    %163 = arith.index_cast %162 : i32 to index
    %164 = memref.load %arg3[%163] : memref<50xf32, #tpu.memory_space<smem>>
    %165 = vector.broadcast %161 : f32 to vector<2x128xf32>
    %166 = arith.subf %30, %165 : vector<2x128xf32>
    %167 = vector.broadcast %164 : f32 to vector<2x128xf32>
    %168 = arith.subf %27, %167 : vector<2x128xf32>
    %169 = arith.mulf %166, %166 : vector<2x128xf32>
    %170 = arith.mulf %168, %168 : vector<2x128xf32>
    %171 = arith.addf %169, %170 : vector<2x128xf32>
    %172 = arith.minimumf %158, %171 : vector<2x128xf32>
    %c10_i32 = arith.constant 10 : i32
    %173 = arith.addi %32, %c10_i32 : i32
    %174 = arith.index_cast %173 : i32 to index
    %175 = memref.load %arg2[%174] : memref<50xf32, #tpu.memory_space<smem>>
    %176 = arith.addi %32, %c10_i32 : i32
    %177 = arith.index_cast %176 : i32 to index
    %178 = memref.load %arg3[%177] : memref<50xf32, #tpu.memory_space<smem>>
    %179 = vector.broadcast %175 : f32 to vector<2x128xf32>
    %180 = arith.subf %30, %179 : vector<2x128xf32>
    %181 = vector.broadcast %178 : f32 to vector<2x128xf32>
    %182 = arith.subf %27, %181 : vector<2x128xf32>
    %183 = arith.mulf %180, %180 : vector<2x128xf32>
    %184 = arith.mulf %182, %182 : vector<2x128xf32>
    %185 = arith.addf %183, %184 : vector<2x128xf32>
    %186 = arith.minimumf %172, %185 : vector<2x128xf32>
    %c11_i32 = arith.constant 11 : i32
    %187 = arith.addi %32, %c11_i32 : i32
    %188 = arith.index_cast %187 : i32 to index
    %189 = memref.load %arg2[%188] : memref<50xf32, #tpu.memory_space<smem>>
    %190 = arith.addi %32, %c11_i32 : i32
    %191 = arith.index_cast %190 : i32 to index
    %192 = memref.load %arg3[%191] : memref<50xf32, #tpu.memory_space<smem>>
    %193 = vector.broadcast %189 : f32 to vector<2x128xf32>
    %194 = arith.subf %30, %193 : vector<2x128xf32>
    %195 = vector.broadcast %192 : f32 to vector<2x128xf32>
    %196 = arith.subf %27, %195 : vector<2x128xf32>
    %197 = arith.mulf %194, %194 : vector<2x128xf32>
    %198 = arith.mulf %196, %196 : vector<2x128xf32>
    %199 = arith.addf %197, %198 : vector<2x128xf32>
    %200 = arith.minimumf %186, %199 : vector<2x128xf32>
    %c12_i32 = arith.constant 12 : i32
    %201 = arith.addi %32, %c12_i32 : i32
    %202 = arith.index_cast %201 : i32 to index
    %203 = memref.load %arg2[%202] : memref<50xf32, #tpu.memory_space<smem>>
    %204 = arith.addi %32, %c12_i32 : i32
    %205 = arith.index_cast %204 : i32 to index
    %206 = memref.load %arg3[%205] : memref<50xf32, #tpu.memory_space<smem>>
    %207 = vector.broadcast %203 : f32 to vector<2x128xf32>
    %208 = arith.subf %30, %207 : vector<2x128xf32>
    %209 = vector.broadcast %206 : f32 to vector<2x128xf32>
    %210 = arith.subf %27, %209 : vector<2x128xf32>
    %211 = arith.mulf %208, %208 : vector<2x128xf32>
    %212 = arith.mulf %210, %210 : vector<2x128xf32>
    %213 = arith.addf %211, %212 : vector<2x128xf32>
    %214 = arith.minimumf %200, %213 : vector<2x128xf32>
    %c13_i32 = arith.constant 13 : i32
    %215 = arith.addi %32, %c13_i32 : i32
    %216 = arith.index_cast %215 : i32 to index
    %217 = memref.load %arg2[%216] : memref<50xf32, #tpu.memory_space<smem>>
    %218 = arith.addi %32, %c13_i32 : i32
    %219 = arith.index_cast %218 : i32 to index
    %220 = memref.load %arg3[%219] : memref<50xf32, #tpu.memory_space<smem>>
    %221 = vector.broadcast %217 : f32 to vector<2x128xf32>
    %222 = arith.subf %30, %221 : vector<2x128xf32>
    %223 = vector.broadcast %220 : f32 to vector<2x128xf32>
    %224 = arith.subf %27, %223 : vector<2x128xf32>
    %225 = arith.mulf %222, %222 : vector<2x128xf32>
    %226 = arith.mulf %224, %224 : vector<2x128xf32>
    %227 = arith.addf %225, %226 : vector<2x128xf32>
    %228 = arith.minimumf %214, %227 : vector<2x128xf32>
    %c14_i32 = arith.constant 14 : i32
    %229 = arith.addi %32, %c14_i32 : i32
    %230 = arith.index_cast %229 : i32 to index
    %231 = memref.load %arg2[%230] : memref<50xf32, #tpu.memory_space<smem>>
    %232 = arith.addi %32, %c14_i32 : i32
    %233 = arith.index_cast %232 : i32 to index
    %234 = memref.load %arg3[%233] : memref<50xf32, #tpu.memory_space<smem>>
    %235 = vector.broadcast %231 : f32 to vector<2x128xf32>
    %236 = arith.subf %30, %235 : vector<2x128xf32>
    %237 = vector.broadcast %234 : f32 to vector<2x128xf32>
    %238 = arith.subf %27, %237 : vector<2x128xf32>
    %239 = arith.mulf %236, %236 : vector<2x128xf32>
    %240 = arith.mulf %238, %238 : vector<2x128xf32>
    %241 = arith.addf %239, %240 : vector<2x128xf32>
    %242 = arith.minimumf %228, %241 : vector<2x128xf32>
    %c15_i32 = arith.constant 15 : i32
    %243 = arith.addi %32, %c15_i32 : i32
    %244 = arith.index_cast %243 : i32 to index
    %245 = memref.load %arg2[%244] : memref<50xf32, #tpu.memory_space<smem>>
    %246 = arith.addi %32, %c15_i32 : i32
    %247 = arith.index_cast %246 : i32 to index
    %248 = memref.load %arg3[%247] : memref<50xf32, #tpu.memory_space<smem>>
    %249 = vector.broadcast %245 : f32 to vector<2x128xf32>
    %250 = arith.subf %30, %249 : vector<2x128xf32>
    %251 = vector.broadcast %248 : f32 to vector<2x128xf32>
    %252 = arith.subf %27, %251 : vector<2x128xf32>
    %253 = arith.mulf %250, %250 : vector<2x128xf32>
    %254 = arith.mulf %252, %252 : vector<2x128xf32>
    %255 = arith.addf %253, %254 : vector<2x128xf32>
    %256 = arith.minimumf %242, %255 : vector<2x128xf32>
    %c16_i32 = arith.constant 16 : i32
    %257 = arith.addi %32, %c16_i32 : i32
    %258 = arith.index_cast %257 : i32 to index
    %259 = memref.load %arg2[%258] : memref<50xf32, #tpu.memory_space<smem>>
    %260 = arith.addi %32, %c16_i32 : i32
    %261 = arith.index_cast %260 : i32 to index
    %262 = memref.load %arg3[%261] : memref<50xf32, #tpu.memory_space<smem>>
    %263 = vector.broadcast %259 : f32 to vector<2x128xf32>
    %264 = arith.subf %30, %263 : vector<2x128xf32>
    %265 = vector.broadcast %262 : f32 to vector<2x128xf32>
    %266 = arith.subf %27, %265 : vector<2x128xf32>
    %267 = arith.mulf %264, %264 : vector<2x128xf32>
    %268 = arith.mulf %266, %266 : vector<2x128xf32>
    %269 = arith.addf %267, %268 : vector<2x128xf32>
    %270 = arith.minimumf %256, %269 : vector<2x128xf32>
    %c17_i32 = arith.constant 17 : i32
    %271 = arith.addi %32, %c17_i32 : i32
    %272 = arith.index_cast %271 : i32 to index
    %273 = memref.load %arg2[%272] : memref<50xf32, #tpu.memory_space<smem>>
    %274 = arith.addi %32, %c17_i32 : i32
    %275 = arith.index_cast %274 : i32 to index
    %276 = memref.load %arg3[%275] : memref<50xf32, #tpu.memory_space<smem>>
    %277 = vector.broadcast %273 : f32 to vector<2x128xf32>
    %278 = arith.subf %30, %277 : vector<2x128xf32>
    %279 = vector.broadcast %276 : f32 to vector<2x128xf32>
    %280 = arith.subf %27, %279 : vector<2x128xf32>
    %281 = arith.mulf %278, %278 : vector<2x128xf32>
    %282 = arith.mulf %280, %280 : vector<2x128xf32>
    %283 = arith.addf %281, %282 : vector<2x128xf32>
    %284 = arith.minimumf %270, %283 : vector<2x128xf32>
    %c18_i32 = arith.constant 18 : i32
    %285 = arith.addi %32, %c18_i32 : i32
    %286 = arith.index_cast %285 : i32 to index
    %287 = memref.load %arg2[%286] : memref<50xf32, #tpu.memory_space<smem>>
    %288 = arith.addi %32, %c18_i32 : i32
    %289 = arith.index_cast %288 : i32 to index
    %290 = memref.load %arg3[%289] : memref<50xf32, #tpu.memory_space<smem>>
    %291 = vector.broadcast %287 : f32 to vector<2x128xf32>
    %292 = arith.subf %30, %291 : vector<2x128xf32>
    %293 = vector.broadcast %290 : f32 to vector<2x128xf32>
    %294 = arith.subf %27, %293 : vector<2x128xf32>
    %295 = arith.mulf %292, %292 : vector<2x128xf32>
    %296 = arith.mulf %294, %294 : vector<2x128xf32>
    %297 = arith.addf %295, %296 : vector<2x128xf32>
    %298 = arith.minimumf %284, %297 : vector<2x128xf32>
    %c19_i32 = arith.constant 19 : i32
    %299 = arith.addi %32, %c19_i32 : i32
    %300 = arith.index_cast %299 : i32 to index
    %301 = memref.load %arg2[%300] : memref<50xf32, #tpu.memory_space<smem>>
    %302 = arith.addi %32, %c19_i32 : i32
    %303 = arith.index_cast %302 : i32 to index
    %304 = memref.load %arg3[%303] : memref<50xf32, #tpu.memory_space<smem>>
    %305 = vector.broadcast %301 : f32 to vector<2x128xf32>
    %306 = arith.subf %30, %305 : vector<2x128xf32>
    %307 = vector.broadcast %304 : f32 to vector<2x128xf32>
    %308 = arith.subf %27, %307 : vector<2x128xf32>
    %309 = arith.mulf %306, %306 : vector<2x128xf32>
    %310 = arith.mulf %308, %308 : vector<2x128xf32>
    %311 = arith.addf %309, %310 : vector<2x128xf32>
    %312 = arith.minimumf %298, %311 : vector<2x128xf32>
    %c20_i32 = arith.constant 20 : i32
    %313 = arith.addi %32, %c20_i32 : i32
    %314 = arith.index_cast %313 : i32 to index
    %315 = memref.load %arg2[%314] : memref<50xf32, #tpu.memory_space<smem>>
    %316 = arith.addi %32, %c20_i32 : i32
    %317 = arith.index_cast %316 : i32 to index
    %318 = memref.load %arg3[%317] : memref<50xf32, #tpu.memory_space<smem>>
    %319 = vector.broadcast %315 : f32 to vector<2x128xf32>
    %320 = arith.subf %30, %319 : vector<2x128xf32>
    %321 = vector.broadcast %318 : f32 to vector<2x128xf32>
    %322 = arith.subf %27, %321 : vector<2x128xf32>
    %323 = arith.mulf %320, %320 : vector<2x128xf32>
    %324 = arith.mulf %322, %322 : vector<2x128xf32>
    %325 = arith.addf %323, %324 : vector<2x128xf32>
    %326 = arith.minimumf %312, %325 : vector<2x128xf32>
    %c21_i32 = arith.constant 21 : i32
    %327 = arith.addi %32, %c21_i32 : i32
    %328 = arith.index_cast %327 : i32 to index
    %329 = memref.load %arg2[%328] : memref<50xf32, #tpu.memory_space<smem>>
    %330 = arith.addi %32, %c21_i32 : i32
    %331 = arith.index_cast %330 : i32 to index
    %332 = memref.load %arg3[%331] : memref<50xf32, #tpu.memory_space<smem>>
    %333 = vector.broadcast %329 : f32 to vector<2x128xf32>
    %334 = arith.subf %30, %333 : vector<2x128xf32>
    %335 = vector.broadcast %332 : f32 to vector<2x128xf32>
    %336 = arith.subf %27, %335 : vector<2x128xf32>
    %337 = arith.mulf %334, %334 : vector<2x128xf32>
    %338 = arith.mulf %336, %336 : vector<2x128xf32>
    %339 = arith.addf %337, %338 : vector<2x128xf32>
    %340 = arith.minimumf %326, %339 : vector<2x128xf32>
    %c22_i32 = arith.constant 22 : i32
    %341 = arith.addi %32, %c22_i32 : i32
    %342 = arith.index_cast %341 : i32 to index
    %343 = memref.load %arg2[%342] : memref<50xf32, #tpu.memory_space<smem>>
    %344 = arith.addi %32, %c22_i32 : i32
    %345 = arith.index_cast %344 : i32 to index
    %346 = memref.load %arg3[%345] : memref<50xf32, #tpu.memory_space<smem>>
    %347 = vector.broadcast %343 : f32 to vector<2x128xf32>
    %348 = arith.subf %30, %347 : vector<2x128xf32>
    %349 = vector.broadcast %346 : f32 to vector<2x128xf32>
    %350 = arith.subf %27, %349 : vector<2x128xf32>
    %351 = arith.mulf %348, %348 : vector<2x128xf32>
    %352 = arith.mulf %350, %350 : vector<2x128xf32>
    %353 = arith.addf %351, %352 : vector<2x128xf32>
    %354 = arith.minimumf %340, %353 : vector<2x128xf32>
    %c23_i32 = arith.constant 23 : i32
    %355 = arith.addi %32, %c23_i32 : i32
    %356 = arith.index_cast %355 : i32 to index
    %357 = memref.load %arg2[%356] : memref<50xf32, #tpu.memory_space<smem>>
    %358 = arith.addi %32, %c23_i32 : i32
    %359 = arith.index_cast %358 : i32 to index
    %360 = memref.load %arg3[%359] : memref<50xf32, #tpu.memory_space<smem>>
    %361 = vector.broadcast %357 : f32 to vector<2x128xf32>
    %362 = arith.subf %30, %361 : vector<2x128xf32>
    %363 = vector.broadcast %360 : f32 to vector<2x128xf32>
    %364 = arith.subf %27, %363 : vector<2x128xf32>
    %365 = arith.mulf %362, %362 : vector<2x128xf32>
    %366 = arith.mulf %364, %364 : vector<2x128xf32>
    %367 = arith.addf %365, %366 : vector<2x128xf32>
    %368 = arith.minimumf %354, %367 : vector<2x128xf32>
    %c24_i32 = arith.constant 24 : i32
    %369 = arith.addi %32, %c24_i32 : i32
    %370 = arith.index_cast %369 : i32 to index
    %371 = memref.load %arg2[%370] : memref<50xf32, #tpu.memory_space<smem>>
    %372 = arith.addi %32, %c24_i32 : i32
    %373 = arith.index_cast %372 : i32 to index
    %374 = memref.load %arg3[%373] : memref<50xf32, #tpu.memory_space<smem>>
    %375 = vector.broadcast %371 : f32 to vector<2x128xf32>
    %376 = arith.subf %30, %375 : vector<2x128xf32>
    %377 = vector.broadcast %374 : f32 to vector<2x128xf32>
    %378 = arith.subf %27, %377 : vector<2x128xf32>
    %379 = arith.mulf %376, %376 : vector<2x128xf32>
    %380 = arith.mulf %378, %378 : vector<2x128xf32>
    %381 = arith.addf %379, %380 : vector<2x128xf32>
    %382 = arith.minimumf %368, %381 : vector<2x128xf32>
    %c25_i32_8 = arith.constant 25 : i32
    %383 = math.sqrt %382 : vector<2x128xf32>
    %c0 = arith.constant 0 : index
    %c0_9 = arith.constant 0 : index
    %c0_10 = arith.constant 0 : index
    %384 = vector.load %arg4[%c0, %c0_9, %c0_10] : memref<1x2x128xf32, #tpu.memory_space<vmem>>, vector<1x2x128xf32>
    %385 = vector.shape_cast %384 : vector<1x2x128xf32> to vector<2x128xf32>
    %386 = vector.shape_cast %383 : vector<2x128xf32> to vector<1x2x128xf32>
    tpu.vector_store %arg4[%c0, %c0_9, %c0_10], %386 {strides = array<i32>} : memref<1x2x128xf32, #tpu.memory_space<vmem>>, vector<1x2x128xf32>,
    %c256_i32_11 = arith.constant 256 : i32
    %387 = vector.broadcast %c256_i32_11 : i32 to vector<2x128xi32>
    %388 = arith.cmpi slt, %7, %387 : vector<2x128xi32>
    %cst_12 = arith.constant 0x7F800000 : f32
    %389 = vector.broadcast %cst_12 : f32 to vector<2x128xf32>
    %390 = arith.select %388, %383, %389 : vector<2x128xi1>, vector<2x128xf32>
    %391 = vector.shape_cast %390 : vector<2x128xf32> to vector<1x2x128xf32>
    %cst_13 = arith.constant dense<0x7F800000> : vector<1xf32>
    %392 = vector.multi_reduction <minimumf>, %391, %cst_13 [1, 2] : vector<1x2x128xf32> to vector<1xf32>
    %393 = vector.shape_cast %392 : vector<1xf32> to vector<1x1x1xf32>
    %394 = vector.extract %393[0, 0, 0] : f32 from vector<1x1x1xf32>
    %cst_14 = arith.constant 0xFF800000 : f32
    %395 = vector.broadcast %cst_14 : f32 to vector<2x128xf32>
    %396 = arith.select %388, %383, %395 : vector<2x128xi1>, vector<2x128xf32>
    %397 = vector.shape_cast %396 : vector<2x128xf32> to vector<1x2x128xf32>
    %cst_15 = arith.constant dense<0xFF800000> : vector<1xf32>
    %398 = vector.multi_reduction <maximumf>, %397, %cst_15 [1, 2] : vector<1x2x128xf32> to vector<1xf32>
    %399 = vector.shape_cast %398 : vector<1xf32> to vector<1x1x1xf32>
    %400 = vector.extract %399[0, 0, 0] : f32 from vector<1x1x1xf32>
    %401 = vector.broadcast %394 : f32 to vector<8x128xf32>
    %c0_16 = arith.constant 0 : index
    %c0_17 = arith.constant 0 : index
    %c0_18 = arith.constant 0 : index
    %c0_19 = arith.constant 0 : index
    %402 = vector.load %arg5[%c0_16, %c0_17, %c0_18, %c0_19] : memref<1x1x8x128xf32, #tpu.memory_space<vmem>>, vector<1x1x8x128xf32>
    %403 = vector.shape_cast %402 : vector<1x1x8x128xf32> to vector<8x128xf32>
    %404 = vector.shape_cast %401 : vector<8x128xf32> to vector<1x1x8x128xf32>
    tpu.vector_store %arg5[%c0_16, %c0_17, %c0_18, %c0_19], %404 {strides = array<i32>} : memref<1x1x8x128xf32, #tpu.memory_space<vmem>>, vector<1x1x8x128xf32>,
    %405 = vector.broadcast %400 : f32 to vector<8x128xf32>
    %c0_20 = arith.constant 0 : index
    %c0_21 = arith.constant 0 : index
    %c0_22 = arith.constant 0 : index
    %c0_23 = arith.constant 0 : index
    %406 = vector.load %arg6[%c0_20, %c0_21, %c0_22, %c0_23] : memref<1x1x8x128xf32, #tpu.memory_space<vmem>>, vector<1x1x8x128xf32>
    %407 = vector.shape_cast %406 : vector<1x1x8x128xf32> to vector<8x128xf32>
    %408 = vector.shape_cast %405 : vector<8x128xf32> to vector<1x1x8x128xf32>
    tpu.vector_store %arg6[%c0_20, %c0_21, %c0_22, %c0_23], %408 {strides = array<i32>} : memref<1x1x8x128xf32, #tpu.memory_space<vmem>>, vector<1x1x8x128xf32>,
    return
  }
  func.func @transform_0(%arg0: i32, %arg1: i32) -> i32 {
    %c0_i32 = arith.constant 0 : i32
    %c0_i32_0 = arith.constant 0 : i32
    return %c0_i32 : i32
  }
  func.func @transform_1(%arg0: i32, %arg1: i32) -> i32 {
    %c0_i32 = arith.constant 0 : i32
    %c0_i32_0 = arith.constant 0 : i32
    return %c0_i32 : i32
  }
  func.func @transform_2(%arg0: i32, %arg1: i32) -> (i32, i32, i32) {
    %c0_i32 = arith.constant 0 : i32
    %c0_i32_0 = arith.constant 0 : i32
    return %arg0, %arg1, %c0_i32 : i32, i32, i32
  }
  func.func @transform_3(%arg0: i32, %arg1: i32) -> (i32, i32, i32, i32) {
    %c0_i32 = arith.constant 0 : i32
    %c0_i32_0 = arith.constant 0 : i32
    %c0_i32_1 = arith.constant 0 : i32
    return %arg0, %arg1, %c0_i32, %c0_i32_0 : i32, i32, i32, i32
  }
  func.func @transform_4(%arg0: i32, %arg1: i32) -> (i32, i32, i32, i32) {
    %c0_i32 = arith.constant 0 : i32
    %c0_i32_0 = arith.constant 0 : i32
    %c0_i32_1 = arith.constant 0 : i32
    return %arg0, %arg1, %c0_i32, %c0_i32_0 : i32, i32, i32, i32
  }
}

</mosaic_0001>

<llo_original>
// kernel: tpu_custom_call.1
$region0: #{tpu_custom_call.1}
  #allocation0 [shape = 'u32[]', space=smem, size = 0x4, offset = 0x4, fixed_abs, tag = 'smem constant byte address 0x4 - core index']
  #allocation1 [shape = 'u32[72,128]{1,0:T(1,128)}', space=vmem, size = 0x9000, scoped, tag = 'internal scratch']
  %s0 = inlined_call_operand.hbm [shape: f32[50], index: 0, kind: input, shape index: {}]
  %s1 = inlined_call_operand.hbm [shape: f32[50], index: 1, kind: input, shape index: {}]
  %s2 = inlined_call_operand.hbm [shape: f32[2,2,128], index: 2, kind: output, shape index: {0}]
  %s3 = inlined_call_operand.hbm [shape: f32[2,1,8,128], index: 3, kind: output, shape index: {1}]
  %s4 = inlined_call_operand.hbm [shape: f32[2,1,8,128], index: 4, kind: output, shape index: {2}]
  %5 = xla_tuple %s2, %s3, %s4
  %s6 = sld [smem:[#allocation0]]
  $region65: #{tpu_custom_call.1} parent=0
    _
  %s8 = ssub.s32 1, %s6
  %s9 = scalar_select 0, %s8, %s6
  $region1: #{tpu_custom_call.1} parent=0
    #allocation2 [shape = 'u8[512]{0}', space=smem, size = 0x200, scoped, tag = 'input window, operand 0, single buffered']
    #allocation3 [shape = 's32[2]{0}', space=sflag, size = 0x8, scoped, tag = 'scoped memory for tpu_custom_call.1']
    #allocation4 [shape = 's32[2]{0}', space=sflag, size = 0x8, scoped, tag = 'scoped memory for tpu_custom_call.1']
    #allocation5 [shape = 'u8[512]{0}', space=smem, size = 0x200, scoped, tag = 'input window, operand 1, single buffered']
    #allocation6 [shape = 's32[1]{0}', space=sflag, size = 0x4, scoped, tag = 'scoped memory for tpu_custom_call.1']
    #allocation7 [shape = 'u8[2048]{0}', space=vmem, size = 0x800, scoped, tag = 'output window, operand 0']
    #allocation8 [shape = 'u8[8192]{0}', space=vmem, size = 0x2000, scoped, tag = 'output window, operand 1']
    #allocation9 [shape = 's32[2]{0}', space=sflag, size = 0x8, scoped, tag = 'scoped memory for tpu_custom_call.1']
    #allocation10 [shape = 'u8[8192]{0}', space=vmem, size = 0x2000, scoped, tag = 'output window, operand 2']
    %10 = vsyncpa [#allocation4], 0
    %11 = vsyncpa [#allocation6], 0
    %12 = vsyncpa [#allocation3], 0
    %s13 = scalar_lea.sflag [#allocation3], 1
    %14 = vsyncpa %s13, 0
    %15 = vsyncpa [#allocation9], 0
    %s16 = scalar_lea.sflag [#allocation9], 1
    %17 = vsyncpa %s16, 0
    loop: start=0, step=1, limit=4
    $region2: #{tpu_custom_call.1} parent=1 // loop_pre_header
      _
    $region3: #{tpu_custom_call.1} parent=1 // loop_header
      %s19 = sphi 0, %s23
      %p20 = scmp.ge.s32.totalorder %s19, 4
      %s26 = sphi 0, %s38
      %s27 = sphi 0, %s34
      %s28 = sphi 0, %s26
      %s29 = sphi 0, %s27
      %s30 = sphi 0, %s28
      %s31 = sphi 0, %s29
      %s39 = sphi 0, %s39
      %s41 = sphi 0, %s39
      %s42 = sphi 0, %s41
      %s56 = sphi 0, %s42
      %s60 = sphi 0, %s60
      %s62 = sphi 0, %s60
      %s63 = sphi 0, %s62
      %s77 = sphi 0, %s63
      %s85 = sphi 0, %s87
      %s88 = sphi 0, %s85
      %s89 = sphi 0, %s88
      %s105 = sphi 0, %s89
      %s113 = sphi 0, %s115
      %s116 = sphi 0, %s113
      %s117 = sphi 0, %s116
      %s133 = sphi 0, %s117
      %s141 = sphi 0, %s143
      %s144 = sphi 0, %s141
      %s145 = sphi 0, %s144
      %s161 = sphi 0, %s145
    $region4: #{tpu_custom_call.1} parent=1 // loop_header_branch
      %22 = sbr.rel (%p20) target = $region8
    $region5: #{tpu_custom_call.1} parent=1 // loop_body
      %s24 = ssub.s32 %s19, 1
      %s25 = ssub.s32 %s19, 2
      %s32 = sadd.s32 1, %s27
      %p33 = scmp.ge.s32.totalorder %s32, 1
      %s34 = scalar_select %p33, 0, %s32
      %s35 = sadd.s32 1, %s26
      %s36 = scalar_select %p33, %s35, %s26
      %p37 = scmp.ge.s32.totalorder %s36, 2
      %s38 = scalar_select %p37, 0, %s36
      %s40 = sadd.s32 %s39, 1
      %p43 = scmp.eq.s32.totalorder %s19, 1
      %p44 = scmp.ne.s32.totalorder %s39, %s41
      %p45 = scmp.eq.s32.totalorder %s19, 0
      %p46 = por %p44, %p45
      %p47 = scmp.ne.s32.totalorder %s39, %s41
      %p48 = scmp.eq.s32.totalorder %s24, 1
      %p49 = por %p47, %p48
      %p50 = scmp.ne.s32.totalorder %s41, %s42
      %p51 = scmp.eq.s32.totalorder %s24, 0
      %p52 = por %p50, %p51
      %p53 = scmp.ne.s32.totalorder %s41, %s42
      %p54 = scmp.eq.s32.totalorder %s25, 1
      %p55 = por %p53, %p54
      %p57 = scmp.ne.s32.totalorder %s42, %s56
      %p58 = scmp.eq.s32.totalorder %s25, 0
      %p59 = por %p57, %p58
      %s61 = sadd.s32 %s60, 1
      %p64 = scmp.eq.s32.totalorder %s19, 1
      %p65 = scmp.ne.s32.totalorder %s60, %s62
      %p66 = scmp.eq.s32.totalorder %s19, 0
      %p67 = por %p65, %p66
      %p68 = scmp.ne.s32.totalorder %s60, %s62
      %p69 = scmp.eq.s32.totalorder %s24, 1
      %p70 = por %p68, %p69
      %p71 = scmp.ne.s32.totalorder %s62, %s63
      %p72 = scmp.eq.s32.totalorder %s24, 0
      %p73 = por %p71, %p72
      %p74 = scmp.ne.s32.totalorder %s62, %s63
      %p75 = scmp.eq.s32.totalorder %s25, 1
      %p76 = por %p74, %p75
      %p78 = scmp.ne.s32.totalorder %s63, %s77
      %p79 = scmp.eq.s32.totalorder %s25, 0
      %p80 = por %p78, %p79
      %s81 = ssub.s32 %s26, %s38
      %s82 = ssub.s32 %s27, %s34
      %s83 = sor.u32 %s81, %s82
      %p84 = scmp.eq.s32.totalorder %s83, 0
      %s86 = sadd.s32 %s85, 1
      %s87 = scalar_select %p84, %s85, %s86
      %p90 = pneg %p84
      %p91 = scmp.eq.s32.totalorder %s19, 1
      %p92 = por %p90, %p91
      %p93 = scmp.ne.s32.totalorder %s85, %s88
      %p94 = scmp.eq.s32.totalorder %s19, 0
      %p95 = por %p93, %p94
      %p96 = scmp.ne.s32.totalorder %s85, %s88
      %p97 = scmp.eq.s32.totalorder %s24, 1
      %p98 = por %p96, %p97
      %p99 = scmp.ne.s32.totalorder %s88, %s89
      %p100 = scmp.eq.s32.totalorder %s24, 0
      %p101 = por %p99, %p100
      %p102 = scmp.ne.s32.totalorder %s88, %s89
      %p103 = scmp.eq.s32.totalorder %s25, 1
      %p104 = por %p102, %p103
      %p106 = scmp.ne.s32.totalorder %s89, %s105
      %p107 = scmp.eq.s32.totalorder %s25, 0
      %p108 = por %p106, %p107
      %s109 = ssub.s32 %s26, %s38
      %s110 = ssub.s32 %s27, %s34
      %s111 = sor.u32 %s109, %s110
      %p112 = scmp.eq.s32.totalorder %s111, 0
      %s114 = sadd.s32 %s113, 1
      %s115 = scalar_select %p112, %s113, %s114
      %p118 = pneg %p112
      %p119 = scmp.eq.s32.totalorder %s19, 1
      %p120 = por %p118, %p119
      %p121 = scmp.ne.s32.totalorder %s113, %s116
      %p122 = scmp.eq.s32.totalorder %s19, 0
      %p123 = por %p121, %p122
      %p124 = scmp.ne.s32.totalorder %s113, %s116
      %p125 = scmp.eq.s32.totalorder %s24, 1
      %p126 = por %p124, %p125
      %p127 = scmp.ne.s32.totalorder %s116, %s117
      %p128 = scmp.eq.s32.totalorder %s24, 0
      %p129 = por %p127, %p128
      %p130 = scmp.ne.s32.totalorder %s116, %s117
      %p131 = scmp.eq.s32.totalorder %s25, 1
      %p132 = por %p130, %p131
      %p134 = scmp.ne.s32.totalorder %s117, %s133
      %p135 = scmp.eq.s32.totalorder %s25, 0
      %p136 = por %p134, %p135
      %s137 = ssub.s32 %s26, %s38
      %s138 = ssub.s32 %s27, %s34
      %s139 = sor.u32 %s137, %s138
      %p140 = scmp.eq.s32.totalorder %s139, 0
      %s142 = sadd.s32 %s141, 1
      %s143 = scalar_select %p140, %s141, %s142
      %p146 = pneg %p140
      %p147 = scmp.eq.s32.totalorder %s19, 1
      %p148 = por %p146, %p147
      %p149 = scmp.ne.s32.totalorder %s141, %s144
      %p150 = scmp.eq.s32.totalorder %s19, 0
      %p151 = por %p149, %p150
      %p152 = scmp.ne.s32.totalorder %s141, %s144
      %p153 = scmp.eq.s32.totalorder %s24, 1
      %p154 = por %p152, %p153
      %p155 = scmp.ne.s32.totalorder %s144, %s145
      %p156 = scmp.eq.s32.totalorder %s24, 0
      %p157 = por %p155, %p156
      %p158 = scmp.ne.s32.totalorder %s144, %s145
      %p159 = scmp.eq.s32.totalorder %s25, 1
      %p160 = por %p158, %p159
      %p162 = scmp.ne.s32.totalorder %s145, %s161
      %p163 = scmp.eq.s32.totalorder %s25, 0
      %p164 = por %p162, %p163
      %p165 = scmp.le.s32.totalorder 1, %s19
      %p166 = scmp.lt.s32.totalorder %s19, 3
      %p167 = pnand %p165, %p166
      %p168 = pneg %p167
      // Predicated region
      $region9: #{tpu_custom_call.1} parent=5 // pred_check
        _
      $region10: #{tpu_custom_call.1} parent=5 // pred_check_branch
        %170 = sbr.rel (%p167) target = $region12
      $region11: #{tpu_custom_call.1} parent=5 // pred_region
        %s171 = ssub.s32 %s19, 1
        // Predicated region
        $region13: #{tpu_custom_call.1} parent=11 // pred_check
          %p172 = pneg %p52
        $region14: #{tpu_custom_call.1} parent=11 // pred_check_branch
          %174 = sbr.rel (%p172) target = $region16
        $region15: #{tpu_custom_call.1} parent=11 // pred_region
          %176 = vsyncadd [#allocation4], 0
          %s178 = sshll.u32 %s0, 4
          %s179 = int_to_ptr.hbm [resolvable:$true] %s178
          %181 = dma.hbm_to_smem %s179, 16, [#allocation2], [#allocation4]
        $region16: #{tpu_custom_call.1} parent=11 // pred_fallthru
          _
        // Predicated region
        $region17: #{tpu_custom_call.1} parent=11 // pred_check
          %p182 = pneg %p73
        $region18: #{tpu_custom_call.1} parent=11 // pred_check_branch
          %184 = sbr.rel (%p182) target = $region20
        $region19: #{tpu_custom_call.1} parent=11 // pred_region
          %186 = vsyncadd [#allocation6], 0
          %s188 = sshll.u32 %s1, 4
          %s189 = int_to_ptr.hbm [resolvable:$true] %s188
          %191 = dma.hbm_to_smem %s189, 16, [#allocation5], [#allocation6]
        $region20: #{tpu_custom_call.1} parent=11 // pred_fallthru
          _
      $region12: #{tpu_custom_call.1} parent=5 // pred_fallthru
        _
      %p192 = scmp.lt.s32.totalorder %s19, 2
      // Predicated region
      $region21: #{tpu_custom_call.1} parent=5 // pred_check
        %p193 = pneg %p192
      $region22: #{tpu_custom_call.1} parent=5 // pred_check_branch
        %195 = sbr.rel (%p193) target = $region24
      $region23: #{tpu_custom_call.1} parent=5 // pred_region
        _
      $region24: #{tpu_custom_call.1} parent=5 // pred_fallthru
        _
      %p196 = scmp.le.s32.totalorder 1, %s19
      %p197 = scmp.lt.s32.totalorder %s19, 3
      %p198 = pnand %p196, %p197
      %p199 = pneg %p198
      // Predicated region
      $region25: #{tpu_custom_call.1} parent=5 // pred_check
        _
      $region26: #{tpu_custom_call.1} parent=5 // pred_check_branch
        %201 = sbr.rel (%p198) target = $region28
      $region27: #{tpu_custom_call.1} parent=5 // pred_region
        %s202 = ssub.s32 %s19, 1
        // Predicated region
        $region29: #{tpu_custom_call.1} parent=27 // pred_check
          %p203 = pneg %p52
        $region30: #{tpu_custom_call.1} parent=27 // pred_check_branch
          %205 = sbr.rel (%p203) target = $region32
        $region31: #{tpu_custom_call.1} parent=27 // pred_region
          %207 = dma.done [#allocation4], 16
        $region32: #{tpu_custom_call.1} parent=27 // pred_fallthru
          _
        // Predicated region
        $region33: #{tpu_custom_call.1} parent=27 // pred_check
          %p208 = pneg %p73
        $region34: #{tpu_custom_call.1} parent=27 // pred_check_branch
          %210 = sbr.rel (%p208) target = $region36
        $region35: #{tpu_custom_call.1} parent=27 // pred_region
          %212 = dma.done [#allocation6], 16
        $region36: #{tpu_custom_call.1} parent=27 // pred_fallthru
          _
        %213 = sfence
        %p214 = pneg %p52
        %p215 = pneg %p49
        %p216 = pneg %p73
        %p217 = pneg %p70
        %p218 = pneg %p101
        %p219 = pneg %p98
        %s220 = sand.u32 %s88, 1
        %s221 = scalar_lea.sflag [#allocation3], %s220
        %s222 = sand.u32 %s88, 1
        %s223 = smul.addr %s222, 2
        %s224 = scalar_lea.vmem [#allocation7], %s223
        %p225 = pneg %p129
        %p226 = pneg %p126
        %s227 = sand.u32 %s24, 1
        %s228 = scalar_lea.sflag [#allocation9], %s227
        %s229 = sand.u32 %s116, 1
        %s230 = smul.addr %s229, 8
        %s231 = scalar_lea.vmem [#allocation8], %s230
        %p232 = pneg %p157
        %p233 = pneg %p154
        %s234 = sand.u32 %s24, 1
        %s235 = scalar_lea.sflag [#allocation9], %s234
        %s236 = sand.u32 %s144, 1
        %s237 = smul.addr %s236, 8
        %s238 = scalar_lea.vmem [#allocation10], %s237
        %s239 = smul.u32 %s29, 256
        %v240 = vlaneseq
        %v241 = vshrl.u32 %v240, 7
        %v242 = vlaneseq
        %v243 = vand.u32 %v242, 127
        %v244 = vmul.u32 %v241, 128
        %v245 = vstv %s239
        %v246 = vadd.s32 %v245, %v244
        %v247 = vadd.s32 %v246, %v243
        %v248 = vcvt.s32.f32 %v247
        %v249 = vmul.f32 %v248, 0.0625
        %v250 = vfloor.f32 %v249
        %v251 = vmul.f32 %v250, 16.0
        %v252 = vsub.f32 %v248, %v251
        %vm253 = vcmp.lt.f32.partialorder %v252, 0.0
        %v254 = vsub.f32 %v250, 1.0
        %v255 = vsel %vm253, %v254, %v250
        %v256 = vadd.f32 %v252, 16.0
        %v257 = vsel %vm253, %v256, %v252
        %vm258 = vcmp.ge.f32.partialorder %v257, 16.0
        %v259 = vadd.f32 %v255, 1.0
        %v260 = vsel %vm258, %v259, %v255
        %v261 = vsub.f32 %v257, 16.0
        %v262 = vsel %vm258, %v261, %v257
        %s263 = smul.u32 %s28, 25
        %s264 = sld [smem:[#allocation2 + %s263]]
        %s265 = sld [smem:[#allocation5 + %s263]]
        %v266 = vstv %s264
        %v267 = vsub.f32 %v262, %v266
        %v268 = vstv %s265
        %v269 = vsub.f32 %v260, %v268
        %v270 = vmul.f32 %v267, %v267
        %v271 = vmul.f32 %v269, %v269
        %v272 = vadd.f32 %v270, %v271
        %s273 = sadd.s32 %s263, 1
        %s274 = sld [smem:[#allocation2 + %s273]]
        %s275 = sld [smem:[#allocation5 + %s273]]
        %v276 = vstv %s274
        %v277 = vsub.f32 %v262, %v276
        %v278 = vstv %s275
        %v279 = vsub.f32 %v260, %v278
        %v280 = vmul.f32 %v277, %v277
        %v281 = vmul.f32 %v279, %v279
        %v282 = vadd.f32 %v280, %v281
        %v283 = vmin.f32 %v272, %v282
        %s284 = sadd.s32 %s263, 2
        %s285 = sld [smem:[#allocation2 + %s284]]
        %s286 = sld [smem:[#allocation5 + %s284]]
        %v287 = vstv %s285
        %v288 = vsub.f32 %v262, %v287
        %v289 = vstv %s286
        %v290 = vsub.f32 %v260, %v289
        %v291 = vmul.f32 %v288, %v288
        %v292 = vmul.f32 %v290, %v290
        %v293 = vadd.f32 %v291, %v292
        %v294 = vmin.f32 %v283, %v293
        %s295 = sadd.s32 %s263, 3
        %s296 = sld [smem:[#allocation2 + %s295]]
        %s297 = sld [smem:[#allocation5 + %s295]]
        %v298 = vstv %s296
        %v299 = vsub.f32 %v262, %v298
        %v300 = vstv %s297
        %v301 = vsub.f32 %v260, %v300
        %v302 = vmul.f32 %v299, %v299
        %v303 = vmul.f32 %v301, %v301
        %v304 = vadd.f32 %v302, %v303
        %v305 = vmin.f32 %v294, %v304
        %s306 = sadd.s32 %s263, 4
        %s307 = sld [smem:[#allocation2 + %s306]]
        %s308 = sld [smem:[#allocation5 + %s306]]
        %v309 = vstv %s307
        %v310 = vsub.f32 %v262, %v309
        %v311 = vstv %s308
        %v312 = vsub.f32 %v260, %v311
        %v313 = vmul.f32 %v310, %v310
        %v314 = vmul.f32 %v312, %v312
        %v315 = vadd.f32 %v313, %v314
        %v316 = vmin.f32 %v305, %v315
        %s317 = sadd.s32 %s263, 5
        %s318 = sld [smem:[#allocation2 + %s317]]
        %s319 = sld [smem:[#allocation5 + %s317]]
        %v320 = vstv %s318
        %v321 = vsub.f32 %v262, %v320
        %v322 = vstv %s319
        %v323 = vsub.f32 %v260, %v322
        %v324 = vmul.f32 %v321, %v321
        %v325 = vmul.f32 %v323, %v323
        %v326 = vadd.f32 %v324, %v325
        %v327 = vmin.f32 %v316, %v326
        %s328 = sadd.s32 %s263, 6
        %s329 = sld [smem:[#allocation2 + %s328]]
        %s330 = sld [smem:[#allocation5 + %s328]]
        %v331 = vstv %s329
        %v332 = vsub.f32 %v262, %v331
        %v333 = vstv %s330
        %v334 = vsub.f32 %v260, %v333
        %v335 = vmul.f32 %v332, %v332
        %v336 = vmul.f32 %v334, %v334
        %v337 = vadd.f32 %v335, %v336
        %v338 = vmin.f32 %v327, %v337
        %s339 = sadd.s32 %s263, 7
        %s340 = sld [smem:[#allocation2 + %s339]]
        %s341 = sld [smem:[#allocation5 + %s339]]
        %v342 = vstv %s340
        %v343 = vsub.f32 %v262, %v342
        %v344 = vstv %s341
        %v345 = vsub.f32 %v260, %v344
        %v346 = vmul.f32 %v343, %v343
        %v347 = vmul.f32 %v345, %v345
        %v348 = vadd.f32 %v346, %v347
        %v349 = vmin.f32 %v338, %v348
        %s350 = sadd.s32 %s263, 8
        %s351 = sld [smem:[#allocation2 + %s350]]
        %s352 = sld [smem:[#allocation5 + %s350]]
        %v353 = vstv %s351
        %v354 = vsub.f32 %v262, %v353
        %v355 = vstv %s352
        %v356 = vsub.f32 %v260, %v355
        %v357 = vmul.f32 %v354, %v354
        %v358 = vmul.f32 %v356, %v356
        %v359 = vadd.f32 %v357, %v358
        %v360 = vmin.f32 %v349, %v359
        %s361 = sadd.s32 %s263, 9
        %s362 = sld [smem:[#allocation2 + %s361]]
        %s363 = sld [smem:[#allocation5 + %s361]]
        %v364 = vstv %s362
        %v365 = vsub.f32 %v262, %v364
        %v366 = vstv %s363
        %v367 = vsub.f32 %v260, %v366
        %v368 = vmul.f32 %v365, %v365
        %v369 = vmul.f32 %v367, %v367
        %v370 = vadd.f32 %v368, %v369
        %v371 = vmin.f32 %v360, %v370
        %s372 = sadd.s32 %s263, 10
        %s373 = sld [smem:[#allocation2 + %s372]]
        %s374 = sld [smem:[#allocation5 + %s372]]
        %v375 = vstv %s373
        %v376 = vsub.f32 %v262, %v375
        %v377 = vstv %s374
        %v378 = vsub.f32 %v260, %v377
        %v379 = vmul.f32 %v376, %v376
        %v380 = vmul.f32 %v378, %v378
        %v381 = vadd.f32 %v379, %v380
        %v382 = vmin.f32 %v371, %v381
        %s383 = sadd.s32 %s263, 11
        %s384 = sld [smem:[#allocation2 + %s383]]
        %s385 = sld [smem:[#allocation5 + %s383]]
        %v386 = vstv %s384
        %v387 = vsub.f32 %v262, %v386
        %v388 = vstv %s385
        %v389 = vsub.f32 %v260, %v388
        %v390 = vmul.f32 %v387, %v387
        %v391 = vmul.f32 %v389, %v389
        %v392 = vadd.f32 %v390, %v391
        %v393 = vmin.f32 %v382, %v392
        %s394 = sadd.s32 %s263, 12
        %s395 = sld [smem:[#allocation2 + %s394]]
        %s396 = sld [smem:[#allocation5 + %s394]]
        %v397 = vstv %s395
        %v398 = vsub.f32 %v262, %v397
        %v399 = vstv %s396
        %v400 = vsub.f32 %v260, %v399
        %v401 = vmul.f32 %v398, %v398
        %v402 = vmul.f32 %v400, %v400
        %v403 = vadd.f32 %v401, %v402
        %v404 = vmin.f32 %v393, %v403
        %s405 = sadd.s32 %s263, 13
        %s406 = sld [smem:[#allocation2 + %s405]]
        %s407 = sld [smem:[#allocation5 + %s405]]
        %v408 = vstv %s406
        %v409 = vsub.f32 %v262, %v408
        %v410 = vstv %s407
        %v411 = vsub.f32 %v260, %v410
        %v412 = vmul.f32 %v409, %v409
        %v413 = vmul.f32 %v411, %v411
        %v414 = vadd.f32 %v412, %v413
        %v415 = vmin.f32 %v404, %v414
        %s416 = sadd.s32 %s263, 14
        %s417 = sld [smem:[#allocation2 + %s416]]
        %s418 = sld [smem:[#allocation5 + %s416]]
        %v419 = vstv %s417
        %v420 = vsub.f32 %v262, %v419
        %v421 = vstv %s418
        %v422 = vsub.f32 %v260, %v421
        %v423 = vmul.f32 %v420, %v420
        %v424 = vmul.f32 %v422, %v422
        %v425 = vadd.f32 %v423, %v424
        %v426 = vmin.f32 %v415, %v425
        %s427 = sadd.s32 %s263, 15
        %s428 = sld [smem:[#allocation2 + %s427]]
        %s429 = sld [smem:[#allocation5 + %s427]]
        %v430 = vstv %s428
        %v431 = vsub.f32 %v262, %v430
        %v432 = vstv %s429
        %v433 = vsub.f32 %v260, %v432
        %v434 = vmul.f32 %v431, %v431
        %v435 = vmul.f32 %v433, %v433
        %v436 = vadd.f32 %v434, %v435
        %v437 = vmin.f32 %v426, %v436
        %s438 = sadd.s32 %s263, 16
        %s439 = sld [smem:[#allocation2 + %s438]]
        %s440 = sld [smem:[#allocation5 + %s438]]
        %v441 = vstv %s439
        %v442 = vsub.f32 %v262, %v441
        %v443 = vstv %s440
        %v444 = vsub.f32 %v260, %v443
        %v445 = vmul.f32 %v442, %v442
        %v446 = vmul.f32 %v444, %v444
        %v447 = vadd.f32 %v445, %v446
        %v448 = vmin.f32 %v437, %v447
        %s449 = sadd.s32 %s263, 17
        %s450 = sld [smem:[#allocation2 + %s449]]
        %s451 = sld [smem:[#allocation5 + %s449]]
        %v452 = vstv %s450
        %v453 = vsub.f32 %v262, %v452
        %v454 = vstv %s451
        %v455 = vsub.f32 %v260, %v454
        %v456 = vmul.f32 %v453, %v453
        %v457 = vmul.f32 %v455, %v455
        %v458 = vadd.f32 %v456, %v457
        %v459 = vmin.f32 %v448, %v458
        %s460 = sadd.s32 %s263, 18
        %s461 = sld [smem:[#allocation2 + %s460]]
        %s462 = sld [smem:[#allocation5 + %s460]]
        %v463 = vstv %s461
        %v464 = vsub.f32 %v262, %v463
        %v465 = vstv %s462
        %v466 = vsub.f32 %v260, %v465
        %v467 = vmul.f32 %v464, %v464
        %v468 = vmul.f32 %v466, %v466
        %v469 = vadd.f32 %v467, %v468
        %v470 = vmin.f32 %v459, %v469
        %s471 = sadd.s32 %s263, 19
        %s472 = sld [smem:[#allocation2 + %s471]]
        %s473 = sld [smem:[#allocation5 + %s471]]
        %v474 = vstv %s472
        %v475 = vsub.f32 %v262, %v474
        %v476 = vstv %s473
        %v477 = vsub.f32 %v260, %v476
        %v478 = vmul.f32 %v475, %v475
        %v479 = vmul.f32 %v477, %v477
        %v480 = vadd.f32 %v478, %v479
        %v481 = vmin.f32 %v470, %v480
        %s482 = sadd.s32 %s263, 20
        %s483 = sld [smem:[#allocation2 + %s482]]
        %s484 = sld [smem:[#allocation5 + %s482]]
        %v485 = vstv %s483
        %v486 = vsub.f32 %v262, %v485
        %v487 = vstv %s484
        %v488 = vsub.f32 %v260, %v487
        %v489 = vmul.f32 %v486, %v486
        %v490 = vmul.f32 %v488, %v488
        %v491 = vadd.f32 %v489, %v490
        %v492 = vmin.f32 %v481, %v491
        %s493 = sadd.s32 %s263, 21
        %s494 = sld [smem:[#allocation2 + %s493]]
        %s495 = sld [smem:[#allocation5 + %s493]]
        %v496 = vstv %s494
        %v497 = vsub.f32 %v262, %v496
        %v498 = vstv %s495
        %v499 = vsub.f32 %v260, %v498
        %v500 = vmul.f32 %v497, %v497
        %v501 = vmul.f32 %v499, %v499
        %v502 = vadd.f32 %v500, %v501
        %v503 = vmin.f32 %v492, %v502
        %s504 = sadd.s32 %s263, 22
        %s505 = sld [smem:[#allocation2 + %s504]]
        %s506 = sld [smem:[#allocation5 + %s504]]
        %v507 = vstv %s505
        %v508 = vsub.f32 %v262, %v507
        %v509 = vstv %s506
        %v510 = vsub.f32 %v260, %v509
        %v511 = vmul.f32 %v508, %v508
        %v512 = vmul.f32 %v510, %v510
        %v513 = vadd.f32 %v511, %v512
        %v514 = vmin.f32 %v503, %v513
        %s515 = sadd.s32 %s263, 23
        %s516 = sld [smem:[#allocation2 + %s515]]
        %s517 = sld [smem:[#allocation5 + %s515]]
        %v518 = vstv %s516
        %v519 = vsub.f32 %v262, %v518
        %v520 = vstv %s517
        %v521 = vsub.f32 %v260, %v520
        %v522 = vmul.f32 %v519, %v519
        %v523 = vmul.f32 %v521, %v521
        %v524 = vadd.f32 %v522, %v523
        %v525 = vmin.f32 %v514, %v524
        %s526 = sadd.s32 %s263, 24
        %s527 = sld [smem:[#allocation2 + %s526]]
        %s528 = sld [smem:[#allocation5 + %s526]]
        %v529 = vstv %s527
        %v530 = vsub.f32 %v262, %v529
        %v531 = vstv %s528
        %v532 = vsub.f32 %v260, %v531
        %v533 = vmul.f32 %v530, %v530
        %v534 = vmul.f32 %v532, %v532
        %v535 = vadd.f32 %v533, %v534
        %v536 = vmin.f32 %v525, %v535
        %v537 = vrsqrt.pop %v536
        %v538 = vmul.f32 %v537, %v536
        %v539 = vmul.f32 %v538, %v537
        %v540 = vmul.f32 0.5, %v539
        %v541 = vsub.f32 1.5, %v540
        %v542 = vmul.f32 %v537, %v541
        %v543 = vmul.f32 %v536, %v542
        %vm544 = vcmp.eq.f32.partialorder %v536, inf
        %v545 = vsel %vm544, %v536, %v543
        %vm546 = vcmp.eq.f32.partialorder %v536, 0.0
        %v547 = vand.u32 %v536, 2147483648
        %v548 = vsel %vm546, %v547, %v545
        %549 = vst [vmem:[%s224] sm:$0x3] %v548
        %vm550 = vcmp.lt.s32.totalorder %v247, 256
        %v551 = vsel %vm550, %v548, inf
        %vm552 = vcmask 1041408
        %v553 = vsel %vm552, %v551, inf
        %554 = vmin.xlane.f32.xlu0 %v553
        %v555 = vpop.xlane.xlu0 %554
        %v556 = vrot.slane %v555, 4
        %v557 = vmin.f32 %v555, %v556
        %v558 = vrot.slane %v557, 2
        %v559 = vmin.f32 %v557, %v558
        %v560 = vrot.slane %v559, 1
        %v561 = vmin.f32 %v559, %v560
        %s562 = vtos %v561
        %v563 = vsel %vm550, %v548, -inf
        %v564 = vsel %vm552, %v563, -inf
        %565 = vmax.xlane.f32.xlu0 %v564
        %v566 = vpop.xlane.xlu0 %565
        %v567 = vrot.slane %v566, 4
        %v568 = vmax.f32 %v566, %v567
        %v569 = vrot.slane %v568, 2
        %v570 = vmax.f32 %v568, %v569
        %v571 = vrot.slane %v570, 1
        %v572 = vmax.f32 %v570, %v571
        %s573 = vtos %v572
        %v574 = vstv %s562
        %575 = vst [vmem:[%s231] sm:$0xff] %v574
        %v576 = vstv %s573
        %577 = vst [vmem:[%s238] sm:$0xff] %v576
        %s578 = sand.u32 %s88, 1
        %s579 = scalar_lea.sflag [#allocation3], %s578
        %s580 = sand.u32 %s88, 1
        %s581 = smul.addr %s580, 2
        %s582 = scalar_lea.vmem [#allocation7], %s581
        %s583 = sand.u32 %s24, 1
        %s584 = scalar_lea.sflag [#allocation9], %s583
        %s585 = sand.u32 %s116, 1
        %s586 = smul.addr %s585, 8
        %s587 = scalar_lea.vmem [#allocation8], %s586
        %s588 = sand.u32 %s24, 1
        %s589 = scalar_lea.sflag [#allocation9], %s588
        %s590 = sand.u32 %s144, 1
        %s591 = smul.addr %s590, 8
        %s592 = scalar_lea.vmem [#allocation10], %s591
        // Predicated region
        $region37: #{tpu_custom_call.1} parent=27 // pred_check
          %p593 = pneg %p98
        $region38: #{tpu_custom_call.1} parent=27 // pred_check_branch
          %595 = sbr.rel (%p593) target = $region40
        $region39: #{tpu_custom_call.1} parent=27 // pred_region
          %597 = vsyncadd %s579, 0
          %s598 = sadd.s32 %s29, %s28
          %s599 = smul.addr %s598, 2
          %s600 = scalar_lea.hbm %s2, %s599
          %s602 = sshll.u32 %s582, 4
          %s603 = int_to_ptr.vmem [resolvable:$true] %s602
          %s604 = sshll.u32 %s600, 4
          %s605 = int_to_ptr.hbm [resolvable:$true] %s604
          %607 = dma.vmem_to_hbm [thread:$0]  %s603, 32, %s605, %s579
        $region40: #{tpu_custom_call.1} parent=27 // pred_fallthru
          _
        // Predicated region
        $region41: #{tpu_custom_call.1} parent=27 // pred_check
          %p608 = pneg %p126
        $region42: #{tpu_custom_call.1} parent=27 // pred_check_branch
          %610 = sbr.rel (%p608) target = $region44
        $region43: #{tpu_custom_call.1} parent=27 // pred_region
          %612 = vsyncadd %s584, 0
          %s613 = sadd.s32 %s29, %s28
          %s614 = smul.addr %s613, 8
          %s615 = scalar_lea.hbm %s3, %s614
          %s617 = sshll.u32 %s587, 4
          %s618 = int_to_ptr.vmem [resolvable:$true] %s617
          %s619 = sshll.u32 %s615, 4
          %s620 = int_to_ptr.hbm [resolvable:$true] %s619
          %622 = dma.vmem_to_hbm [thread:$0]  %s618, 128, %s620, %s584
        $region44: #{tpu_custom_call.1} parent=27 // pred_fallthru
          _
        // Predicated region
        $region45: #{tpu_custom_call.1} parent=27 // pred_check
          %p623 = pneg %p154
        $region46: #{tpu_custom_call.1} parent=27 // pred_check_branch
          %625 = sbr.rel (%p623) target = $region48
        $region47: #{tpu_custom_call.1} parent=27 // pred_region
          %627 = vsyncadd %s589, 0
          %s628 = sadd.s32 %s29, %s28
          %s629 = smul.addr %s628, 8
          %s630 = scalar_lea.hbm %s4, %s629
          %s632 = sshll.u32 %s592, 4
          %s633 = int_to_ptr.vmem [resolvable:$true] %s632
          %s634 = sshll.u32 %s630, 4
          %s635 = int_to_ptr.hbm [resolvable:$true] %s634
          %637 = dma.vmem_to_hbm [thread:$0]  %s633, 128, %s635, %s589
        $region48: #{tpu_custom_call.1} parent=27 // pred_fallthru
          _
      $region28: #{tpu_custom_call.1} parent=5 // pred_fallthru
        _
      %p638 = scmp.le.s32.totalorder 2, %s19
      // Predicated region
      $region49: #{tpu_custom_call.1} parent=5 // pred_check
        %p639 = pneg %p638
      $region50: #{tpu_custom_call.1} parent=5 // pred_check_branch
        %641 = sbr.rel (%p639) target = $region52
      $region51: #{tpu_custom_call.1} parent=5 // pred_region
        %s642 = ssub.s32 %s19, 2
        // Predicated region
        $region53: #{tpu_custom_call.1} parent=51 // pred_check
          %p643 = pneg %p104
        $region54: #{tpu_custom_call.1} parent=51 // pred_check_branch
          %645 = sbr.rel (%p643) target = $region56
        $region55: #{tpu_custom_call.1} parent=51 // pred_region
          %s646 = sand.u32 %s89, 1
          %s647 = scalar_lea.sflag [#allocation3], %s646
          %s648 = sand.u32 %s89, 1
          %s649 = smul.addr %s648, 2
          %s650 = scalar_lea.vmem [#allocation7], %s649
          %652 = dma.done %s647, 32
        $region56: #{tpu_custom_call.1} parent=51 // pred_fallthru
          _
        // Predicated region
        $region57: #{tpu_custom_call.1} parent=51 // pred_check
          %p653 = pneg %p132
        $region58: #{tpu_custom_call.1} parent=51 // pred_check_branch
          %655 = sbr.rel (%p653) target = $region60
        $region59: #{tpu_custom_call.1} parent=51 // pred_region
          %s656 = sand.u32 %s25, 1
          %s657 = scalar_lea.sflag [#allocation9], %s656
          %s658 = sand.u32 %s117, 1
          %s659 = smul.addr %s658, 8
          %s660 = scalar_lea.vmem [#allocation8], %s659
          %662 = dma.done %s657, 128
        $region60: #{tpu_custom_call.1} parent=51 // pred_fallthru
          _
        // Predicated region
        $region61: #{tpu_custom_call.1} parent=51 // pred_check
          %p663 = pneg %p160
        $region62: #{tpu_custom_call.1} parent=51 // pred_check_branch
          %665 = sbr.rel (%p663) target = $region64
        $region63: #{tpu_custom_call.1} parent=51 // pred_region
          %s666 = sand.u32 %s25, 1
          %s667 = scalar_lea.sflag [#allocation9], %s666
          %s668 = sand.u32 %s145, 1
          %s669 = smul.addr %s668, 8
          %s670 = scalar_lea.vmem [#allocation10], %s669
          %672 = dma.done %s667, 128
        $region64: #{tpu_custom_call.1} parent=51 // pred_fallthru
          _
      $region52: #{tpu_custom_call.1} parent=5 // pred_fallthru
        _
    $region6: #{tpu_custom_call.1} parent=1 // loop_footer
      %s23 = sadd.s32 1, %s19
    $region7: #{tpu_custom_call.1} parent=1 // loop_footer_branch
      %18 = sbr.rel target = $region3
    $region8: #{tpu_custom_call.1} parent=1 // loop_exit
      _
    %673 = vsyncpa [#allocation3], 1
    %s674 = scalar_lea.sflag [#allocation3], 1
    %675 = vsyncpa %s674, 1
    %676 = vsyncpa [#allocation9], 1
    %s677 = scalar_lea.sflag [#allocation9], 1
    %678 = vsyncpa %s677, 1
    %679 = vsyncpa [#allocation4], 1
    %s680 = scalar_lea.sflag [#allocation4], 1
    %681 = vsyncpa %s680, 1
    %682 = vsyncpa [#allocation6], 1

</llo_original>
